<compile_context>
chip_gen: v7x
topology: tpu7x:2x2x1
jax: 0.10.0
libtpu: 0.0.40
codegen_flags: <defaults>
</compile_context>

<pallas_src>
import functools

import jax
import jax.numpy as jnp
from jax.experimental import pallas as pl
from jax.experimental.pallas import tpu as pltpu


OUT_LANES = 128  # lane-dense packed output width: [probs | value | zero padding]


def _round_up(x, m):
    return (x + m - 1) // m * m


def _actor_critic_kernel(
    x_ref,                 # [TB, state_dim]
    w1_ref, b1_ref,        # feature extractor        [S, H], [1, H]
    wh_ref, bh_ref,        # fused actor|critic hidden [H, 2H], [1, 2H]
    whd_ref, bhd_ref,      # fused block-diag heads    [2H, 128], [1, 128]
    out_ref,               # [TB, 128]  (probs in lanes <A, value in lane A, 0 elsewhere)
    *, action_dim,
):
    x = x_ref[...]

    # shared feature extractor: ReLU(x @ W1 + b1)
    feats = jnp.dot(x, w1_ref[...], preferred_element_type=jnp.float32) + b1_ref[...]
    feats = jnp.maximum(feats, 0.0)

    # fused actor/critic hidden layer: one 128-lane matmul instead of two 64-lane ones
    h = jnp.dot(feats, wh_ref[...], preferred_element_type=jnp.float32) + bh_ref[...]
    h = jnp.maximum(h, 0.0)                       # [TB, 2H] = [ha | hc]

    # fused heads via block-diagonal weight: lanes <A = actor logits, lane A = value
    head = jnp.dot(h, whd_ref[...], preferred_element_type=jnp.float32) + bhd_ref[...]

    lane = jax.lax.broadcasted_iota(jnp.int32, head.shape, dimension=1)
    act_mask = lane < action_dim

    # masked softmax over the real action lanes only (padded lanes -> -inf-ish)
    logits = jnp.where(act_mask, head, jnp.float32(-1e30))
    m = jnp.max(logits, axis=-1, keepdims=True)
    e = jnp.where(act_mask, jnp.exp(logits - m), 0.0)
    denom = jnp.sum(e, axis=-1, keepdims=True)
    probs = e / denom                              # exact divide keeps 1e-5 parity

    # lane-dense packed store: probs | value | zeros  (single unmasked 128-lane vst)
    out_ref[...] = probs + jnp.where(lane == action_dim, head, 0.0)


def pack_params(params, action_dim):
    """Fuse actor/critic weights into the lane-dense layout the kernel expects."""
    hidden = params["w1"].shape[1]
    assert action_dim + 1 <= OUT_LANES

    wh = jnp.concatenate([params["wa1"], params["wc1"]], axis=1)   # [H, 2H]
    bh = jnp.concatenate([params["ba1"], params["bc1"]], axis=1)   # [1, 2H]

    whd = jnp.zeros((2 * hidden, OUT_LANES), jnp.float32)
    whd = whd.at[:hidden, :action_dim].set(params["wa2"])
    whd = whd.at[hidden:, action_dim:action_dim + 1].set(params["wc2"])
    bhd = jnp.zeros((1, OUT_LANES), jnp.float32)
    bhd = bhd.at[:, :action_dim].set(params["ba2"])
    bhd = bhd.at[:, action_dim:action_dim + 1].set(params["bc2"])

    return dict(w1=params["w1"], b1=params["b1"], wh=wh, bh=bh, whd=whd, bhd=bhd)


def actor_critic_forward(state, packed, action_dim):
    """Fused ActorCritic forward pass: returns (action_probs, state_value)."""
    B, state_dim = state.shape

    # Batch tile: >=128/256 for real PPO rollout batches; tiny B pads to one tile.
    TB = 256 if B >= 256 else _round_up(max(B, 8), 8)
    B_pad = _round_up(B, TB)
    if B_pad != B:
        state = jnp.pad(state, ((0, B_pad - B), (0, 0)))

    grid = (B_pad // TB,)

    def full(arr):  # whole-array, grid-invariant block (weights stay VMEM-resident)
        return pl.BlockSpec(arr.shape, lambda i: (0,) * arr.ndim)

    kernel = functools.partial(_actor_critic_kernel, action_dim=action_dim)
    out = pl.pallas_call(
        kernel,
        out_shape=jax.ShapeDtypeStruct((B_pad, OUT_LANES), jnp.float32),
        grid=grid,
        in_specs=[
            pl.BlockSpec((TB, state_dim), lambda i: (i, 0)),
            full(packed["w1"]), full(packed["b1"]),
            full(packed["wh"]), full(packed["bh"]),
            full(packed["whd"]), full(packed["bhd"]),
        ],
        out_specs=pl.BlockSpec((TB, OUT_LANES), lambda i: (i, 0)),
        compiler_params=pltpu.CompilerParams(
            dimension_semantics=("parallel",),        # megacore / 2-TC sharding on v7x
            vmem_limit_bytes=32 * 1024 * 1024,        # tiny footprint; safe on v5e/v6e/v7x
        ),
    )(state, packed["w1"], packed["b1"], packed["wh"], packed["bh"],
      packed["whd"], packed["bhd"])

    probs = out[:B, :action_dim]
    value = out[:B, action_dim:action_dim + 1]
    return probs, value


def init_params(key, state_dim, action_dim, hidden_dim=64):
    """Deterministic PyTorch-Linear-style init: U(-1/sqrt(fan_in), 1/sqrt(fan_in))."""
    def linear(k, fan_in, fan_out):
        kw, kb = jax.random.split(k)
        bound = 1.0 / jnp.sqrt(fan_in)
        w = jax.random.uniform(kw, (fan_in, fan_out), jnp.float32, -bound, bound)
        b = jax.random.uniform(kb, (1, fan_out), jnp.float32, -bound, bound)
        return w, b

    k1, k2, k3, k4, k5 = jax.random.split(key, 5)
    w1, b1 = linear(k1, state_dim, hidden_dim)
    wa1, ba1 = linear(k2, hidden_dim, hidden_dim)
    wa2, ba2 = linear(k3, hidden_dim, action_dim)
    wc1, bc1 = linear(k4, hidden_dim, hidden_dim)
    wc2, bc2 = linear(k5, hidden_dim, 1)
    return dict(
        w1=w1, b1=b1, wa1=wa1, ba1=ba1, wa2=wa2, ba2=ba2,
        wc1=wc1, bc1=bc1, wc2=wc2, bc2=bc2,
    )


def reference_forward(state, p):
    """Pure-JAX reference mirroring the PyTorch module for a correctness check."""
    feats = jnp.maximum(state @ p["w1"] + p["b1"], 0.0)
    ha = jnp.maximum(feats @ p["wa1"] + p["ba1"], 0.0)
    logits = ha @ p["wa2"] + p["ba2"]
    probs = jax.nn.softmax(logits, axis=-1)
    hc = jnp.maximum(feats @ p["wc1"] + p["bc1"], 0.0)
    value = hc @ p["wc2"] + p["bc2"]
    return probs, value


if __name__ == "__main__":
    key = jax.random.PRNGKey(0)
    k_params, k_state = jax.random.split(key)

    batch, state_dim, action_dim, hidden_dim = 2, 8, 4, 64
    params = init_params(k_params, state_dim, action_dim, hidden_dim)
    state = jax.random.normal(k_state, (batch, state_dim), jnp.float32)

    packed = pack_params(params, action_dim)
    probs, value = actor_critic_forward(state, packed, action_dim)
    jax.block_until_ready((probs, value))

    ref_probs, ref_value = reference_forward(state, params)
    assert probs.shape == (batch, action_dim)
    assert value.shape == (batch, 1)
    assert jnp.allclose(probs, ref_probs, atol=1e-5, rtol=1e-5)
    assert jnp.allclose(value, ref_value, atol=1e-5, rtol=1e-5)
    assert jnp.allclose(jnp.sum(probs, axis=-1), 1.0, atol=1e-5)

    print("KERNEL_OK")
</pallas_src>

<mosaic_0001>
module attributes {stable_mosaic.version = 11 : i64} {
  func.func @_actor_critic_kernel(%arg0: i32, %arg1: memref<8x8xf32, #tpu.memory_space<vmem>>, %arg2: memref<8x64xf32, #tpu.memory_space<vmem>>, %arg3: memref<1x64xf32, #tpu.memory_space<vmem>>, %arg4: memref<64x128xf32, #tpu.memory_space<vmem>>, %arg5: memref<1x128xf32, #tpu.memory_space<vmem>>, %arg6: memref<128x128xf32, #tpu.memory_space<vmem>>, %arg7: memref<1x128xf32, #tpu.memory_space<vmem>>, %arg8: memref<8x128xf32, #tpu.memory_space<vmem>>) attributes {dimension_semantics = [#tpu.dimension_semantics<parallel>], iteration_bounds = array<i64: 1>, scalar_prefetch = 0 : i64, scratch_operands = 0 : i64, tpu.core_type = #tpu.core_type<tc>, window_params = [{transform_indices = @transform_0, window_bounds = array<i64: 8, 8>}, {pipeline_mode = #tpu.pipeline_mode<synchronous>, transform_indices = @transform_1, window_bounds = array<i64: 8, 64>}, {pipeline_mode = #tpu.pipeline_mode<synchronous>, transform_indices = @transform_2, window_bounds = array<i64: 1, 64>}, {pipeline_mode = #tpu.pipeline_mode<synchronous>, transform_indices = @transform_3, window_bounds = array<i64: 64, 128>}, {pipeline_mode = #tpu.pipeline_mode<synchronous>, transform_indices = @transform_4, window_bounds = array<i64: 1, 128>}, {pipeline_mode = #tpu.pipeline_mode<synchronous>, transform_indices = @transform_5, window_bounds = array<i64: 128, 128>}, {pipeline_mode = #tpu.pipeline_mode<synchronous>, transform_indices = @transform_6, window_bounds = array<i64: 1, 128>}, {transform_indices = @transform_7, window_bounds = array<i64: 8, 128>}]} {
    %c0 = arith.constant 0 : index
    %c0_0 = arith.constant 0 : index
    %0 = vector.load %arg1[%c0, %c0_0] : memref<8x8xf32, #tpu.memory_space<vmem>>, vector<8x8xf32>
    %c0_1 = arith.constant 0 : index
    %c0_2 = arith.constant 0 : index
    %1 = vector.load %arg2[%c0_1, %c0_2] : memref<8x64xf32, #tpu.memory_space<vmem>>, vector<8x64xf32>
    %cst = arith.constant dense<0.000000e+00> : vector<8x64xf32>
    %2 = tpu.matmul %0, %1, %cst {dimension_numbers = #tpu.dot_dimension_numbers<[1], [0], [0], [1], [0, 0, 1, 1], [], []>} : vector<8x8xf32>, vector<8x64xf32>, vector<8x64xf32> -> vector<8x64xf32>
    %c0_3 = arith.constant 0 : index
    %c0_4 = arith.constant 0 : index
    %3 = vector.load %arg3[%c0_3, %c0_4] : memref<1x64xf32, #tpu.memory_space<vmem>>, vector<1x64xf32>
    %4 = vector.broadcast %3 : vector<1x64xf32> to vector<8x64xf32>
    %5 = arith.addf %2, %4 : vector<8x64xf32>
    %cst_5 = arith.constant 0.000000e+00 : f32
    %6 = vector.broadcast %cst_5 : f32 to vector<8x64xf32>
    %7 = arith.maximumf %5, %6 : vector<8x64xf32>
    %c0_6 = arith.constant 0 : index
    %c0_7 = arith.constant 0 : index
    %8 = vector.load %arg4[%c0_6, %c0_7] : memref<64x128xf32, #tpu.memory_space<vmem>>, vector<64x128xf32>
    %cst_8 = arith.constant dense<0.000000e+00> : vector<8x128xf32>
    %9 = tpu.matmul %7, %8, %cst_8 {dimension_numbers = #tpu.dot_dimension_numbers<[1], [0], [0], [1], [0, 0, 1, 1], [], []>} : vector<8x64xf32>, vector<64x128xf32>, vector<8x128xf32> -> vector<8x128xf32>
    %c0_9 = arith.constant 0 : index
    %c0_10 = arith.constant 0 : index
    %10 = vector.load %arg5[%c0_9, %c0_10] : memref<1x128xf32, #tpu.memory_space<vmem>>, vector<1x128xf32>
    %11 = vector.broadcast %10 : vector<1x128xf32> to vector<8x128xf32>
    %12 = arith.addf %9, %11 : vector<8x128xf32>
    %cst_11 = arith.constant 0.000000e+00 : f32
    %13 = vector.broadcast %cst_11 : f32 to vector<8x128xf32>
    %14 = arith.maximumf %12, %13 : vector<8x128xf32>
    %c0_12 = arith.constant 0 : index
    %c0_13 = arith.constant 0 : index
    %15 = vector.load %arg6[%c0_12, %c0_13] : memref<128x128xf32, #tpu.memory_space<vmem>>, vector<128x128xf32>
    %cst_14 = arith.constant dense<0.000000e+00> : vector<8x128xf32>
    %16 = tpu.matmul %14, %15, %cst_14 {dimension_numbers = #tpu.dot_dimension_numbers<[1], [0], [0], [1], [0, 0, 1, 1], [], []>} : vector<8x128xf32>, vector<128x128xf32>, vector<8x128xf32> -> vector<8x128xf32>
    %c0_15 = arith.constant 0 : index
    %c0_16 = arith.constant 0 : index
    %17 = vector.load %arg7[%c0_15, %c0_16] : memref<1x128xf32, #tpu.memory_space<vmem>>, vector<1x128xf32>
    %18 = vector.broadcast %17 : vector<1x128xf32> to vector<8x128xf32>
    %19 = arith.addf %16, %18 : vector<8x128xf32>
    %20 = tpu.iota {dimensions = array<i32: 1>} : vector<8x128xi32>
    %c4_i32 = arith.constant 4 : i32
    %21 = vector.broadcast %c4_i32 : i32 to vector<8x128xi32>
    %22 = arith.cmpi slt, %20, %21 : vector<8x128xi32>
    %cst_17 = arith.constant -1.000000e+30 : f32
    %23 = vector.broadcast %cst_17 : f32 to vector<8x128xf32>
    %24 = arith.select %22, %19, %23 : vector<8x128xi1>, vector<8x128xf32>
    %cst_18 = arith.constant dense<0xFF800000> : vector<8xf32>
    %25 = vector.multi_reduction <maximumf>, %24, %cst_18 [1] : vector<8x128xf32> to vector<8xf32>
    %26 = vector.shape_cast %25 : vector<8xf32> to vector<8x1xf32>
    %27 = vector.broadcast %26 : vector<8x1xf32> to vector<8x128xf32>
    %28 = arith.subf %24, %27 : vector<8x128xf32>
    %29 = math.exp %28 : vector<8x128xf32>
    %cst_19 = arith.constant 0.000000e+00 : f32
    %30 = vector.broadcast %cst_19 : f32 to vector<8x128xf32>
    %31 = arith.select %22, %29, %30 : vector<8x128xi1>, vector<8x128xf32>
    %cst_20 = arith.constant dense<0.000000e+00> : vector<8xf32>
    %32 = vector.multi_reduction <add>, %31, %cst_20 [1] : vector<8x128xf32> to vector<8xf32>
    %33 = vector.shape_cast %32 : vector<8xf32> to vector<8x1xf32>
    %34 = vector.broadcast %33 : vector<8x1xf32> to vector<8x128xf32>
    %35 = arith.divf %31, %34 : vector<8x128xf32>
    %c4_i32_21 = arith.constant 4 : i32
    %36 = vector.broadcast %c4_i32_21 : i32 to vector<8x128xi32>
    %37 = arith.cmpi eq, %20, %36 : vector<8x128xi32>
    %cst_22 = arith.constant 0.000000e+00 : f32
    %38 = vector.broadcast %cst_22 : f32 to vector<8x128xf32>
    %39 = arith.select %37, %19, %38 : vector<8x128xi1>, vector<8x128xf32>
    %40 = arith.addf %35, %39 : vector<8x128xf32>
    %c0_23 = arith.constant 0 : index
    %c0_24 = arith.constant 0 : index
    %41 = vector.load %arg8[%c0_23, %c0_24] : memref<8x128xf32, #tpu.memory_space<vmem>>, vector<8x128xf32>
    tpu.vector_store %arg8[%c0_23, %c0_24], %40 {strides = array<i32>} : memref<8x128xf32, #tpu.memory_space<vmem>>, vector<8x128xf32>,
    return
  }
  func.func @transform_0(%arg0: i32) -> (i32, i32) {
    %c0_i32 = arith.constant 0 : i32
    %c0_i32_0 = arith.constant 0 : i32
    return %arg0, %c0_i32 : i32, i32
  }
  func.func @transform_1(%arg0: i32) -> (i32, i32) {
    %c0_i32 = arith.constant 0 : i32
    %c0_i32_0 = arith.constant 0 : i32
    %c0_i32_1 = arith.constant 0 : i32
    return %c0_i32, %c0_i32_0 : i32, i32
  }
  func.func @transform_2(%arg0: i32) -> (i32, i32) {
    %c0_i32 = arith.constant 0 : i32
    %c0_i32_0 = arith.constant 0 : i32
    %c0_i32_1 = arith.constant 0 : i32
    return %c0_i32, %c0_i32_0 : i32, i32
  }
  func.func @transform_3(%arg0: i32) -> (i32, i32) {
    %c0_i32 = arith.constant 0 : i32
    %c0_i32_0 = arith.constant 0 : i32
    %c0_i32_1 = arith.constant 0 : i32
    return %c0_i32, %c0_i32_0 : i32, i32
  }
  func.func @transform_4(%arg0: i32) -> (i32, i32) {
    %c0_i32 = arith.constant 0 : i32
    %c0_i32_0 = arith.constant 0 : i32
    %c0_i32_1 = arith.constant 0 : i32
    return %c0_i32, %c0_i32_0 : i32, i32
  }
  func.func @transform_5(%arg0: i32) -> (i32, i32) {
    %c0_i32 = arith.constant 0 : i32
    %c0_i32_0 = arith.constant 0 : i32
    %c0_i32_1 = arith.constant 0 : i32
    return %c0_i32, %c0_i32_0 : i32, i32
  }
  func.func @transform_6(%arg0: i32) -> (i32, i32) {
    %c0_i32 = arith.constant 0 : i32
    %c0_i32_0 = arith.constant 0 : i32
    %c0_i32_1 = arith.constant 0 : i32
    return %c0_i32, %c0_i32_0 : i32, i32
  }
  func.func @transform_7(%arg0: i32) -> (i32, i32) {
    %c0_i32 = arith.constant 0 : i32
    %c0_i32_0 = arith.constant 0 : i32
    return %arg0, %c0_i32 : i32, i32
  }
}

</mosaic_0001>

<llo_original>
// kernel: tpu_custom_call.1
$region0: #{tpu_custom_call.1}
  #allocation0 [shape = 'u32[]', space=smem, size = 0x4, offset = 0x4, fixed_abs, tag = 'smem constant byte address 0x4 - core index']
  #allocation1 [shape = 'u32[144,128]{1,0:T(1,128)}', space=vmem, size = 0x12000, scoped, tag = 'internal scratch']
  %s0 = inlined_call_operand.hbm [shape: f32[8,8], index: 0, kind: input, shape index: {}]
  %s1 = inlined_call_operand.hbm [shape: f32[8,64], index: 1, kind: input, shape index: {}]
  %s2 = inlined_call_operand.vmem [shape: f32[1,64], index: 2, kind: input, shape index: {}]
  %s3 = inlined_call_operand.hbm [shape: f32[64,128], index: 3, kind: input, shape index: {}]
  %s4 = inlined_call_operand.vmem [shape: f32[1,128], index: 4, kind: input, shape index: {}]
  %s5 = inlined_call_operand.hbm [shape: f32[128,128], index: 5, kind: input, shape index: {}]
  %s6 = inlined_call_operand.vmem [shape: f32[1,128], index: 6, kind: input, shape index: {}]
  %s7 = inlined_call_operand.hbm [shape: f32[8,128], index: 7, kind: output, shape index: {}]
  %s8 = sld [smem:[#allocation0]]
  $region54: #{tpu_custom_call.1} parent=0
    _
  %s10 = ssub.s32 1, %s8
  %s11 = scalar_select 0, %s10, %s8
  $region1: #{tpu_custom_call.1} parent=0
    #allocation2 [shape = 'u8[4096]{0}', space=vmem, size = 0x1000, scoped, tag = 'input window, operand 0, single buffered']
    #allocation3 [shape = 's32[1]{0}', space=sflag, size = 0x4, scoped, tag = 'scoped memory for tpu_custom_call.1']
    #allocation4 [shape = 's32[1]{0}', space=sflag, size = 0x4, scoped, tag = 'scoped memory for tpu_custom_call.1']
    #allocation5 [shape = 'u8[4096]{0}', space=vmem, size = 0x1000, scoped, tag = 'input window, operand 1, single buffered']
    #allocation6 [shape = 's32[1]{0}', space=sflag, size = 0x4, scoped, tag = 'scoped memory for tpu_custom_call.1']
    #allocation7 [shape = 'u8[32768]{0}', space=vmem, size = 0x8000, scoped, tag = 'input window, operand 3, single buffered']
    #allocation8 [shape = 'u8[65536]{0}', space=vmem, size = 0x10000, scoped, tag = 'input window, operand 5, single buffered']
    #allocation9 [shape = 's32[1]{0}', space=sflag, size = 0x4, scoped, tag = 'scoped memory for tpu_custom_call.1']
    #allocation10 [shape = 'u8[4096]{0}', space=vmem, size = 0x1000, scoped, tag = 'output window, operand 0, single buffered']
    %12 = vsyncpa [#allocation3], 0
    %13 = vsyncpa [#allocation6], 0
    %14 = vsyncpa [#allocation9], 0
    %15 = vsyncpa [#allocation4], 0
    // Predicated region
    $region2: #{tpu_custom_call.1} parent=1 // pred_check
      _
    $region3: #{tpu_custom_call.1} parent=1 // pred_check_branch
      %17 = sbr.rel (0) target = $region5
    $region4: #{tpu_custom_call.1} parent=1 // pred_region
      %s19 = ssub.s32 128, 128
      %20 = vsyncadd [#allocation3], %s19
      %s22 = sshll.u32 [#allocation2], 4
      %s23 = int_to_ptr.vmem [resolvable:$true] %s22
      %25 = dma.hbm_to_vmem [thread:$0]  %s0, 128, %s23, [#allocation3]
    $region5: #{tpu_custom_call.1} parent=1 // pred_fallthru
      _
    // Predicated region
    $region6: #{tpu_custom_call.1} parent=1 // pred_check
      _
    $region7: #{tpu_custom_call.1} parent=1 // pred_check_branch
      %27 = sbr.rel (0) target = $region9
    $region8: #{tpu_custom_call.1} parent=1 // pred_region
      %s29 = ssub.s32 128, 128
      %30 = vsyncadd [#allocation6], %s29
      %s32 = sshll.u32 [#allocation5], 4
      %s33 = int_to_ptr.vmem [resolvable:$true] %s32
      %35 = dma.hbm_to_vmem [thread:$0]  %s1, 128, %s33, [#allocation6]
    $region9: #{tpu_custom_call.1} parent=1 // pred_fallthru
      _
    // Predicated region
    $region10: #{tpu_custom_call.1} parent=1 // pred_check
      _
    $region11: #{tpu_custom_call.1} parent=1 // pred_check_branch
      %37 = sbr.rel (0) target = $region13
    $region12: #{tpu_custom_call.1} parent=1 // pred_region
      _
    $region13: #{tpu_custom_call.1} parent=1 // pred_fallthru
      _
    // Predicated region
    $region14: #{tpu_custom_call.1} parent=1 // pred_check
      _
    $region15: #{tpu_custom_call.1} parent=1 // pred_check_branch
      %39 = sbr.rel (0) target = $region17
    $region16: #{tpu_custom_call.1} parent=1 // pred_region
      %s41 = ssub.s32 1024, 1024
      %42 = vsyncadd [#allocation6], %s41
      %s43 = sshll.u32 [#allocation7], 4
      %s44 = int_to_ptr.vmem [resolvable:$true] %s43
      %49 = dma.hbm_to_vmem [thread:$0]  %s3, 1024, %s44, [#allocation6], 128, 128, 8
    $region17: #{tpu_custom_call.1} parent=1 // pred_fallthru
      _
    // Predicated region
    $region18: #{tpu_custom_call.1} parent=1 // pred_check
      _
    $region19: #{tpu_custom_call.1} parent=1 // pred_check_branch
      %51 = sbr.rel (0) target = $region21
    $region20: #{tpu_custom_call.1} parent=1 // pred_region
      _
    $region21: #{tpu_custom_call.1} parent=1 // pred_fallthru
      _
    // Predicated region
    $region22: #{tpu_custom_call.1} parent=1 // pred_check
      _
    $region23: #{tpu_custom_call.1} parent=1 // pred_check_branch
      %53 = sbr.rel (0) target = $region25
    $region24: #{tpu_custom_call.1} parent=1 // pred_region
      %s55 = ssub.s32 2048, 2048
      %56 = vsyncadd [#allocation9], %s55
      %s57 = sshll.u32 [#allocation8], 4
      %s58 = int_to_ptr.vmem [resolvable:$true] %s57
      %63 = dma.hbm_to_vmem [thread:$0]  %s5, 2048, %s58, [#allocation9], 128, 128, 8
    $region25: #{tpu_custom_call.1} parent=1 // pred_fallthru
      _
    // Predicated region
    $region26: #{tpu_custom_call.1} parent=1 // pred_check
      _
    $region27: #{tpu_custom_call.1} parent=1 // pred_check_branch
      %65 = sbr.rel (0) target = $region29
    $region28: #{tpu_custom_call.1} parent=1 // pred_region
      _
    $region29: #{tpu_custom_call.1} parent=1 // pred_fallthru
      _
    // Predicated region
    $region30: #{tpu_custom_call.1} parent=1 // pred_check
      _
    $region31: #{tpu_custom_call.1} parent=1 // pred_check_branch
      %67 = sbr.rel (0) target = $region33
    $region32: #{tpu_custom_call.1} parent=1 // pred_region
      %68 = dma.done [#allocation3], 128
    $region33: #{tpu_custom_call.1} parent=1 // pred_fallthru
      _
    // Predicated region
    $region34: #{tpu_custom_call.1} parent=1 // pred_check
      _
    $region35: #{tpu_custom_call.1} parent=1 // pred_check_branch
      %70 = sbr.rel (0) target = $region37
    $region36: #{tpu_custom_call.1} parent=1 // pred_region
      %71 = dma.done [#allocation6], 128
    $region37: #{tpu_custom_call.1} parent=1 // pred_fallthru
      _
    // Predicated region
    $region38: #{tpu_custom_call.1} parent=1 // pred_check
      _
    $region39: #{tpu_custom_call.1} parent=1 // pred_check_branch
      %73 = sbr.rel (0) target = $region41
    $region40: #{tpu_custom_call.1} parent=1 // pred_region
      %74 = dma.done [#allocation6], 1024
    $region41: #{tpu_custom_call.1} parent=1 // pred_fallthru
      _
    // Predicated region
    $region42: #{tpu_custom_call.1} parent=1 // pred_check
      _
    $region43: #{tpu_custom_call.1} parent=1 // pred_check_branch
      %76 = sbr.rel (0) target = $region45
    $region44: #{tpu_custom_call.1} parent=1 // pred_region
      %77 = dma.done [#allocation9], 2048
    $region45: #{tpu_custom_call.1} parent=1 // pred_fallthru
      _
    %v78 = vld [vmem:[#allocation2] sm:$0xff]
    %v79 = vld [vmem:[#allocation5] sm:$0xff]
    %v80 = vld [vmem:[%s2] sm:$0x1]
    %v82 = vlaneseq
    %v83 = vshrl.u32 %v82, 7
    %v84 = vsub.s32 0, %v83
    %v85 = vrot.slane %v80, %v84
    %vm87 = vcmask 64512
    %v89 = vsel %vm87, %v78, 0
    %91 = vmatprep.subr.mxu0 0.0
    %92 = vmatpush1.msra.mxu0 %v79
    %93 = vmatprep.subr.mxu0 0.0
    %94 = vmatpush1.msra.mxu0 0.0
    %95 = vmatprep.subr.mxu0 0.0
    %96 = vmatpush1.msra.mxu0 0.0
    %97 = vmatprep.subr.mxu0 0.0
    %98 = vmatpush1.msra.mxu0 0.0
    %99 = vmatprep.subr.mxu0 0.0
    %100 = vmatpush1.msra.mxu0 0.0
    %101 = vmatprep.subr.mxu0 0.0
    %102 = vmatpush1.msra.mxu0 0.0
    %103 = vmatprep.subr.mxu0 0.0
    %104 = vmatpush1.msra.mxu0 0.0
    %105 = vmatprep.subr.mxu0 0.0
    %106 = vmatpush1.msra.mxu0 0.0
    %107 = vmatprep.subr.mxu0 0.0
    %108 = vmatpush1.msra.mxu0 0.0
    %109 = vmatprep.subr.mxu0 0.0
    %110 = vmatpush1.msra.mxu0 0.0
    %111 = vmatprep.subr.mxu0 0.0
    %112 = vmatpush1.msra.mxu0 0.0
    %113 = vmatprep.subr.mxu0 0.0
    %114 = vmatpush1.msra.mxu0 0.0
    %115 = vmatprep.subr.mxu0 0.0
    %116 = vmatpush1.msra.mxu0 0.0
    %117 = vmatprep.subr.mxu0 0.0
    %118 = vmatpush1.msra.mxu0 0.0
    %119 = vmatprep.subr.mxu0 0.0
    %120 = vmatpush1.msra.mxu0 0.0
    %121 = vmatprep.subr.mxu0 0.0
    %122 = vmatpush1.msra.mxu0 0.0
    %123 = vmatprep.subr.mxu0 0.0
    %124 = vmatpush1.msra.mxu0 0.0
    %125 = vmatprep.subr.mxu0 0.0
    %126 = vmatpush1.msra.mxu0 0.0
    %127 = vmatprep.subr.mxu0 0.0
    %128 = vmatpush1.msra.mxu0 0.0
    %129 = vmatprep.subr.mxu0 0.0
    %130 = vmatpush1.msra.mxu0 0.0
    %131 = vmatprep.subr.mxu0 0.0
    %132 = vmatpush1.msra.mxu0 0.0
    %133 = vmatprep.subr.mxu0 0.0
    %134 = vmatpush1.msra.mxu0 0.0
    %135 = vmatprep.subr.mxu0 0.0
    %136 = vmatpush1.msra.mxu0 0.0
    %137 = vmatprep.subr.mxu0 0.0
    %138 = vmatpush1.msra.mxu0 0.0
    %139 = vmatprep.subr.mxu0 0.0
    %140 = vmatpush1.msra.mxu0 0.0
    %141 = vmatprep.subr.mxu0 0.0
    %142 = vmatpush1.msra.mxu0 0.0
    %143 = vmatprep.subr.mxu0 0.0
    %144 = vmatpush1.msra.mxu0 0.0
    %145 = vmatprep.subr.mxu0 0.0
    %146 = vmatpush1.msra.mxu0 0.0
    %147 = vmatprep.subr.mxu0 0.0
    %148 = vmatpush1.msra.mxu0 0.0
    %149 = vmatprep.subr.mxu0 0.0
    %150 = vmatpush1.msra.mxu0 0.0
    %151 = vmatprep.subr.mxu0 0.0
    %152 = vmatpush1.msra.mxu0 0.0
    %153 = vmatprep.subr.mxu0 0.0
    %154 = vmatpush1.msra.mxu0 0.0
    %155 = vmatprep.mubr.f32.mxu0 0.0
    %156 = vmatmul.mubr.f32.gmra.mrb[0].mxu0 %v89
    %v157 = vpop.f32.mrb[0].mxu0
    %v158 = vadd.f32 %v85, %v157
    %v159 = vpop.f32.mrb[0].mxu0
    %160 = vdwg.mxu0
    %v161 = vmax.f32 %v158, 0.0
    %v162 = vld [vmem:[#allocation7] sm:$0xff]
    %v163 = vld [vmem:[#allocation7 + $0x8] sm:$0xff]
    %v164 = vld [vmem:[#allocation7 + $0x10] sm:$0xff]
    %v165 = vld [vmem:[#allocation7 + $0x18] sm:$0xff]
    %v166 = vld [vmem:[#allocation7 + $0x20] sm:$0xff]
    %v167 = vld [vmem:[#allocation7 + $0x28] sm:$0xff]
    %v168 = vld [vmem:[#allocation7 + $0x30] sm:$0xff]
    %v169 = vld [vmem:[#allocation7 + $0x38] sm:$0xff]
    %v170 = vld [vmem:[%s4] sm:$0x1]
    %v172 = vlaneseq
    %v173 = vshrl.u32 %v172, 7
    %v174 = vsub.s32 0, %v173
    %v175 = vrot.slane %v170, %v174
    %vm177 = vcmask 523264
    %v179 = vsel %vm177, %v161, 0
    %181 = vmatprep.subr.mxu0 0.0
    %182 = vmatpush1.msra.mxu0 %v162
    %183 = vmatprep.subr.mxu0 0.0
    %184 = vmatpush1.msra.mxu0 %v163
    %185 = vmatprep.subr.mxu0 0.0
    %186 = vmatpush1.msra.mxu0 %v164
    %187 = vmatprep.subr.mxu0 0.0
    %188 = vmatpush1.msra.mxu0 %v165
    %189 = vmatprep.subr.mxu0 0.0
    %190 = vmatpush1.msra.mxu0 %v166
    %191 = vmatprep.subr.mxu0 0.0
    %192 = vmatpush1.msra.mxu0 %v167
    %193 = vmatprep.subr.mxu0 0.0
    %194 = vmatpush1.msra.mxu0 %v168
    %195 = vmatprep.subr.mxu0 0.0
    %196 = vmatpush1.msra.mxu0 %v169
    %197 = vmatprep.subr.mxu0 0.0
    %198 = vmatpush1.msra.mxu0 0.0
    %199 = vmatprep.subr.mxu0 0.0
    %200 = vmatpush1.msra.mxu0 0.0
    %201 = vmatprep.subr.mxu0 0.0
    %202 = vmatpush1.msra.mxu0 0.0
    %203 = vmatprep.subr.mxu0 0.0
    %204 = vmatpush1.msra.mxu0 0.0
    %205 = vmatprep.subr.mxu0 0.0
    %206 = vmatpush1.msra.mxu0 0.0
    %207 = vmatprep.subr.mxu0 0.0
    %208 = vmatpush1.msra.mxu0 0.0
    %209 = vmatprep.subr.mxu0 0.0
    %210 = vmatpush1.msra.mxu0 0.0
    %211 = vmatprep.subr.mxu0 0.0
    %212 = vmatpush1.msra.mxu0 0.0
    %213 = vmatprep.subr.mxu0 0.0
    %214 = vmatpush1.msra.mxu0 0.0
    %215 = vmatprep.subr.mxu0 0.0
    %216 = vmatpush1.msra.mxu0 0.0
    %217 = vmatprep.subr.mxu0 0.0
    %218 = vmatpush1.msra.mxu0 0.0
    %219 = vmatprep.subr.mxu0 0.0
    %220 = vmatpush1.msra.mxu0 0.0
    %221 = vmatprep.subr.mxu0 0.0
    %222 = vmatpush1.msra.mxu0 0.0
    %223 = vmatprep.subr.mxu0 0.0
    %224 = vmatpush1.msra.mxu0 0.0
    %225 = vmatprep.subr.mxu0 0.0
    %226 = vmatpush1.msra.mxu0 0.0
    %227 = vmatprep.subr.mxu0 0.0
    %228 = vmatpush1.msra.mxu0 0.0
    %229 = vmatprep.subr.mxu0 0.0
    %230 = vmatpush1.msra.mxu0 0.0
    %231 = vmatprep.subr.mxu0 0.0
    %232 = vmatpush1.msra.mxu0 0.0
    %233 = vmatprep.subr.mxu0 0.0
    %234 = vmatpush1.msra.mxu0 0.0
    %235 = vmatprep.subr.mxu0 0.0
    %236 = vmatpush1.msra.mxu0 0.0
    %237 = vmatprep.subr.mxu0 0.0
    %238 = vmatpush1.msra.mxu0 0.0
    %239 = vmatprep.subr.mxu0 0.0
    %240 = vmatpush1.msra.mxu0 0.0
    %241 = vmatprep.subr.mxu0 0.0
    %242 = vmatpush1.msra.mxu0 0.0
    %243 = vmatprep.subr.mxu0 0.0
    %244 = vmatpush1.msra.mxu0 0.0
    %245 = vmatprep.mubr.f32.mxu0 0.0
    %246 = vmatmul.mubr.f32.gmra.mrb[0].mxu0 %v179
    %v247 = vpop.f32.mrb[0].mxu0
    %v248 = vadd.f32 %v175, %v247
    %v249 = vpop.f32.mrb[0].mxu0
    %250 = vdwg.mxu0
    %v251 = vmax.f32 %v248, 0.0
    %v252 = vld [vmem:[#allocation8] sm:$0xff]
    %v253 = vld [vmem:[#allocation8 + $0x8] sm:$0xff]
    %v254 = vld [vmem:[#allocation8 + $0x10] sm:$0xff]
    %v255 = vld [vmem:[#allocation8 + $0x18] sm:$0xff]
    %v256 = vld [vmem:[#allocation8 + $0x20] sm:$0xff]
    %v257 = vld [vmem:[#allocation8 + $0x28] sm:$0xff]
    %v258 = vld [vmem:[#allocation8 + $0x30] sm:$0xff]
    %v259 = vld [vmem:[#allocation8 + $0x38] sm:$0xff]
    %v260 = vld [vmem:[#allocation8 + $0x40] sm:$0xff]
    %v261 = vld [vmem:[#allocation8 + $0x48] sm:$0xff]
    %v262 = vld [vmem:[#allocation8 + $0x50] sm:$0xff]
    %v263 = vld [vmem:[#allocation8 + $0x58] sm:$0xff]
    %v264 = vld [vmem:[#allocation8 + $0x60] sm:$0xff]
    %v265 = vld [vmem:[#allocation8 + $0x68] sm:$0xff]
    %v266 = vld [vmem:[#allocation8 + $0x70] sm:$0xff]
    %v267 = vld [vmem:[#allocation8 + $0x78] sm:$0xff]
    %v268 = vld [vmem:[%s6] sm:$0x1]
    %v270 = vlaneseq
    %v271 = vshrl.u32 %v270, 7
    %v272 = vsub.s32 0, %v271
    %v273 = vrot.slane %v268, %v272
    %275 = vmatprep.subr.mxu0 0.0
    %276 = vmatpush1.msra.mxu0 %v252
    %277 = vmatprep.subr.mxu0 0.0
    %278 = vmatpush1.msra.mxu0 %v253
    %279 = vmatprep.subr.mxu0 0.0
    %280 = vmatpush1.msra.mxu0 %v254
    %281 = vmatprep.subr.mxu0 0.0
    %282 = vmatpush1.msra.mxu0 %v255
    %283 = vmatprep.subr.mxu0 0.0
    %284 = vmatpush1.msra.mxu0 %v256
    %285 = vmatprep.subr.mxu0 0.0
    %286 = vmatpush1.msra.mxu0 %v257
    %287 = vmatprep.subr.mxu0 0.0
    %288 = vmatpush1.msra.mxu0 %v258
    %289 = vmatprep.subr.mxu0 0.0
    %290 = vmatpush1.msra.mxu0 %v259
    %291 = vmatprep.subr.mxu0 0.0
    %292 = vmatpush1.msra.mxu0 %v260
    %293 = vmatprep.subr.mxu0 0.0
    %294 = vmatpush1.msra.mxu0 %v261
    %295 = vmatprep.subr.mxu0 0.0
    %296 = vmatpush1.msra.mxu0 %v262
    %297 = vmatprep.subr.mxu0 0.0
    %298 = vmatpush1.msra.mxu0 %v263
    %299 = vmatprep.subr.mxu0 0.0
    %300 = vmatpush1.msra.mxu0 %v264
    %301 = vmatprep.subr.mxu0 0.0
    %302 = vmatpush1.msra.mxu0 %v265
    %303 = vmatprep.subr.mxu0 0.0
    %304 = vmatpush1.msra.mxu0 %v266
    %305 = vmatprep.subr.mxu0 0.0
    %306 = vmatpush1.msra.mxu0 %v267
    %307 = vmatprep.subr.mxu0 0.0
    %308 = vmatpush1.msra.mxu0 0.0
    %309 = vmatprep.subr.mxu0 0.0
    %310 = vmatpush1.msra.mxu0 0.0
    %311 = vmatprep.subr.mxu0 0.0
    %312 = vmatpush1.msra.mxu0 0.0
    %313 = vmatprep.subr.mxu0 0.0
    %314 = vmatpush1.msra.mxu0 0.0
    %315 = vmatprep.subr.mxu0 0.0
    %316 = vmatpush1.msra.mxu0 0.0
    %317 = vmatprep.subr.mxu0 0.0
    %318 = vmatpush1.msra.mxu0 0.0
    %319 = vmatprep.subr.mxu0 0.0
    %320 = vmatpush1.msra.mxu0 0.0
    %321 = vmatprep.subr.mxu0 0.0
    %322 = vmatpush1.msra.mxu0 0.0
    %323 = vmatprep.subr.mxu0 0.0
    %324 = vmatpush1.msra.mxu0 0.0
    %325 = vmatprep.subr.mxu0 0.0
    %326 = vmatpush1.msra.mxu0 0.0
    %327 = vmatprep.subr.mxu0 0.0
    %328 = vmatpush1.msra.mxu0 0.0
    %329 = vmatprep.subr.mxu0 0.0
    %330 = vmatpush1.msra.mxu0 0.0
    %331 = vmatprep.subr.mxu0 0.0
    %332 = vmatpush1.msra.mxu0 0.0
    %333 = vmatprep.subr.mxu0 0.0
    %334 = vmatpush1.msra.mxu0 0.0
    %335 = vmatprep.subr.mxu0 0.0
    %336 = vmatpush1.msra.mxu0 0.0
    %337 = vmatprep.subr.mxu0 0.0
    %338 = vmatpush1.msra.mxu0 0.0
    %339 = vmatprep.mubr.f32.mxu0 0.0
    %340 = vmatmul.mubr.f32.gmra.mrb[0].mxu0 %v251
    %v341 = vpop.f32.mrb[0].mxu0
    %v342 = vadd.f32 %v273, %v341
    %v343 = vpop.f32.mrb[0].mxu0
    %344 = vdwg.mxu0
    %v345 = vlaneseq
    %v346 = vand.u32 %v345, 127
    %vm347 = vcmp.lt.s32.totalorder %v346, 4
    %v348 = vsel %vm347, %v342, -1e+30
    %349 = vmax.xlane.f32.xlu0 %v348
    %v350 = vpop.xlane.xlu0 %349
    %v351 = vsub.f32 %v348, %v350
    %v352 = vmul.f32 %v351, 1.442695
    %v353 = vpow.pop %v352
    %v354 = vsel %vm347, %v353, 0.0
    %355 = vadd.xlane.f32.xlu0 %v354
    %v356 = vpop.xlane.xlu0 %355
    %v357 = vrcp.pop %v356
    %v358 = vmul.f32 %v354, %v357
    %vm359 = vcmp.eq.s32.totalorder %v346, 4
    %v360 = vsel %vm359, %v342, 0.0
    %v361 = vadd.f32 %v358, %v360
    %362 = vst [vmem:[#allocation10] sm:$0xff] %v361
    // Predicated region
    $region46: #{tpu_custom_call.1} parent=1 // pred_check
      _
    $region47: #{tpu_custom_call.1} parent=1 // pred_check_branch
      %364 = sbr.rel (0) target = $region49
    $region48: #{tpu_custom_call.1} parent=1 // pred_region
      %s366 = ssub.s32 128, 128
      %367 = vsyncadd [#allocation4], %s366
      %s369 = sshll.u32 [#allocation10], 4
      %s370 = int_to_ptr.vmem [resolvable:$true] %s369
      %372 = dma.vmem_to_hbm [thread:$0]  %s370, 128, %s7, [#allocation4]
    $region49: #{tpu_custom_call.1} parent=1 // pred_fallthru
      _
    // Predicated region
    $region50: #{tpu_custom_call.1} parent=1 // pred_check
      _
    $region51: #{tpu_custom_call.1} parent=1 // pred_check_branch
      %374 = sbr.rel (0) target = $region53
    $region52: #{tpu_custom_call.1} parent=1 // pred_region
      %375 = dma.done [#allocation4], 128
    $region53: #{tpu_custom_call.1} parent=1 // pred_fallthru
      _
    %376 = vsyncpa [#allocation3], 1
    %377 = vsyncpa [#allocation6], 1
    %378 = vsyncpa [#allocation9], 1
    %379 = vsyncpa [#allocation4], 1

</llo_original>
